<compile_context>
chip_gen: v7x
topology: tpu7x:2x2x1
jax: 0.10.0
libtpu: 0.0.40
codegen_flags: <defaults>
</compile_context>

<pallas_src>
import math

import jax
import jax.numpy as jnp
from jax.experimental import pallas as pl
from jax.experimental.pallas import tpu as pltpu


def patch_embedding_kernel(xp_ref, wt_ref, pe_ref, o_ref):
    # xp_ref: (TM, P)  flat patch-row tile (native dtype)
    # wt_ref: (P, D)   transposed Linear weight (resident, native dtype)
    # pe_ref: (TM, D)  positional embedding aligned to every tile (resident, f32)
    # o_ref : (TM, D)  output tile (f32, lane-dense last dim)
    y = jnp.dot(xp_ref[...], wt_ref[...], preferred_element_type=jnp.float32)  # MXU
    o_ref[...] = (y + pe_ref[...]).astype(o_ref.dtype)


def _positional_embedding(num_rows, d_model):
    # Same math as the PyTorch PositionalEmbedding buffer, only the rows we need.
    position = jnp.arange(num_rows, dtype=jnp.float32)[:, None]
    div_term = jnp.exp(
        jnp.arange(0, d_model, 2, dtype=jnp.float32) * (-(math.log(10000.0) / d_model))
    )
    pe = jnp.zeros((num_rows, d_model), dtype=jnp.float32)
    pe = pe.at[:, 0::2].set(jnp.sin(position * div_term))
    pe = pe.at[:, 1::2].set(jnp.cos(position * div_term))
    return pe


def patch_embedding_forward(x, weight, patch_len, stride, padding, d_model, *, target_rows=512):
    """x: (B, n_vars, L); weight: (d_model, patch_len) (nn.Linear, bias=False).

    Returns (out, n_vars) with out: (B*n_vars, N, d_model) float32.
    """
    B, n_vars, L = x.shape

    # --- glue: replication pad + overlapping unfold (patch extraction), native dtype ---
    xp = jnp.pad(x, ((0, 0), (0, 0), (0, padding)), mode="edge")
    Lp = L + padding
    N = (Lp - patch_len) // stride + 1
    idx = jnp.arange(N)[:, None] * stride + jnp.arange(patch_len)[None, :]     # (N, P)
    patches = xp[:, :, idx].reshape(B * n_vars * N, patch_len)                 # (BN*N, P)

    pe = _positional_embedding(N, d_model)                                     # (N, D) f32
    wt = weight.T                                                              # (P, D)

    BN = B * n_vars
    total = BN * N

    # Tile TM flat rows per grid step, TM = rows_per_tile * N so every tile starts at a
    # series boundary (keeps PE alignment) and TM is a sublane multiple of 8.
    base = 8 // math.gcd(N, 8)                      # smallest k with (k*N) % 8 == 0
    rpt = max(1, target_rows // max(N, 1))          # aim for ~target_rows rows per tile
    rpt = pl.cdiv(rpt, base) * base                 # keep TM a multiple of 8
    rpt = min(rpt, BN)
    tm = rpt * N
    if tm % 8 != 0 or tm >= total:                  # tiny problems: single full-extent block
        rpt = BN
        tm = total

    # Positional embedding replicated to one tile; identical for every grid step.
    pe_tile = jnp.tile(pe, (rpt, 1))                                           # (TM, D)

    grid = (pl.cdiv(total, tm),)

    out_flat = pl.pallas_call(
        patch_embedding_kernel,
        out_shape=jax.ShapeDtypeStruct((total, d_model), jnp.float32),
        grid_spec=pltpu.PrefetchScalarGridSpec(
            num_scalar_prefetch=0,
            grid=grid,
            in_specs=[
                # flat patch-row tile
                pl.BlockSpec((tm, patch_len), lambda i: (i, 0)),
                # weight stays resident (constant block index)
                pl.BlockSpec((patch_len, d_model), lambda i: (0, 0)),
                # replicated positional-embedding tile, resident
                pl.BlockSpec((tm, d_model), lambda i: (0, 0)),
            ],
            out_specs=pl.BlockSpec((tm, d_model), lambda i: (i, 0)),
        ),
        compiler_params=pltpu.CompilerParams(
            dimension_semantics=("parallel",),
        ),
    )(patches, wt, pe_tile)

    return out_flat.reshape(BN, N, d_model), n_vars


if __name__ == "__main__":
    # Small deterministic example consistent with the module's forward.
    B, n_vars, L = 2, 4, 64
    d_model, patch_len, stride, padding = 128, 16, 8, 8

    key = jax.random.PRNGKey(0)
    kx, kw = jax.random.split(key)
    x = jax.random.normal(kx, (B, n_vars, L), dtype=jnp.float32)
    # nn.Linear(patch_len, d_model, bias=False) weight: (d_model, patch_len)
    weight = jax.random.normal(kw, (d_model, patch_len), dtype=jnp.float32) / jnp.sqrt(
        float(patch_len)
    )

    out, nv = patch_embedding_forward(x, weight, patch_len, stride, padding, d_model)
    out = jax.block_until_ready(out)

    # Pure-JAX reference of the PyTorch forward (eval mode).
    xp = jnp.pad(x, ((0, 0), (0, 0), (0, padding)), mode="edge")
    N = (L + padding - patch_len) // stride + 1
    idx = jnp.arange(N)[:, None] * stride + jnp.arange(patch_len)[None, :]
    patches = xp[:, :, idx].reshape(B * n_vars, N, patch_len)
    pe = _positional_embedding(N, d_model)
    ref = (
        jnp.einsum("rnp,dp->rnd", patches, weight, precision=jax.lax.Precision.HIGHEST)
        + pe[None]
    )

    assert nv == n_vars, nv
    assert out.shape == (B * n_vars, N, d_model), out.shape
    assert out.dtype == jnp.float32
    max_err = float(jnp.max(jnp.abs(out - ref)))
    assert jnp.allclose(out, ref, atol=1e-2, rtol=1e-2), max_err
    print("KERNEL_OK")
</pallas_src>

<mosaic_0001>
module attributes {stable_mosaic.version = 11 : i64} {
  func.func @patch_embedding_kernel(%arg0: i32, %arg1: memref<64x16xf32, #tpu.memory_space<vmem>>, %arg2: memref<16x128xf32, #tpu.memory_space<vmem>>, %arg3: memref<64x128xf32, #tpu.memory_space<vmem>>, %arg4: memref<64x128xf32, #tpu.memory_space<vmem>>) attributes {dimension_semantics = [#tpu.dimension_semantics<parallel>], iteration_bounds = array<i64: 1>, scalar_prefetch = 0 : i64, scratch_operands = 0 : i64, tpu.core_type = #tpu.core_type<tc>, window_params = [{transform_indices = @transform_0, window_bounds = array<i64: 64, 16>}, {pipeline_mode = #tpu.pipeline_mode<synchronous>, transform_indices = @transform_1, window_bounds = array<i64: 16, 128>}, {pipeline_mode = #tpu.pipeline_mode<synchronous>, transform_indices = @transform_2, window_bounds = array<i64: 64, 128>}, {transform_indices = @transform_3, window_bounds = array<i64: 64, 128>}]} {
    %c0 = arith.constant 0 : index
    %c0_0 = arith.constant 0 : index
    %0 = vector.load %arg1[%c0, %c0_0] : memref<64x16xf32, #tpu.memory_space<vmem>>, vector<64x16xf32>
    %c0_1 = arith.constant 0 : index
    %c0_2 = arith.constant 0 : index
    %1 = vector.load %arg2[%c0_1, %c0_2] : memref<16x128xf32, #tpu.memory_space<vmem>>, vector<16x128xf32>
    %cst = arith.constant dense<0.000000e+00> : vector<64x128xf32>
    %2 = tpu.matmul %0, %1, %cst {dimension_numbers = #tpu.dot_dimension_numbers<[1], [0], [0], [1], [0, 0, 1, 1], [], []>} : vector<64x16xf32>, vector<16x128xf32>, vector<64x128xf32> -> vector<64x128xf32>
    %c0_3 = arith.constant 0 : index
    %c0_4 = arith.constant 0 : index
    %3 = vector.load %arg3[%c0_3, %c0_4] : memref<64x128xf32, #tpu.memory_space<vmem>>, vector<64x128xf32>
    %4 = arith.addf %2, %3 : vector<64x128xf32>
    %c0_5 = arith.constant 0 : index
    %c0_6 = arith.constant 0 : index
    %5 = vector.load %arg4[%c0_5, %c0_6] : memref<64x128xf32, #tpu.memory_space<vmem>>, vector<64x128xf32>
    tpu.vector_store %arg4[%c0_5, %c0_6], %4 {strides = array<i32>} : memref<64x128xf32, #tpu.memory_space<vmem>>, vector<64x128xf32>,
    return
  }
  func.func @transform_0(%arg0: i32) -> (i32, i32) {
    %c0_i32 = arith.constant 0 : i32
    %c0_i32_0 = arith.constant 0 : i32
    return %arg0, %c0_i32 : i32, i32
  }
  func.func @transform_1(%arg0: i32) -> (i32, i32) {
    %c0_i32 = arith.constant 0 : i32
    %c0_i32_0 = arith.constant 0 : i32
    %c0_i32_1 = arith.constant 0 : i32
    return %c0_i32, %c0_i32_0 : i32, i32
  }
  func.func @transform_2(%arg0: i32) -> (i32, i32) {
    %c0_i32 = arith.constant 0 : i32
    %c0_i32_0 = arith.constant 0 : i32
    %c0_i32_1 = arith.constant 0 : i32
    return %c0_i32, %c0_i32_0 : i32, i32
  }
  func.func @transform_3(%arg0: i32) -> (i32, i32) {
    %c0_i32 = arith.constant 0 : i32
    %c0_i32_0 = arith.constant 0 : i32
    return %arg0, %c0_i32 : i32, i32
  }
}

</mosaic_0001>

<llo_original>
// kernel: tpu_custom_call.1
$region0: #{tpu_custom_call.1}
  #allocation0 [shape = 'u32[]', space=smem, size = 0x4, offset = 0x4, fixed_abs, tag = 'smem constant byte address 0x4 - core index']
  #allocation1 [shape = 'u32[144,128]{1,0:T(1,128)}', space=vmem, size = 0x12000, scoped, tag = 'internal scratch']
  %s0 = inlined_call_operand.vmem [shape: f32[64,16], index: 0, kind: input, shape index: {}]
  %s1 = inlined_call_operand.vmem [shape: f32[16,128], index: 1, kind: input, shape index: {}]
  %s2 = inlined_call_operand.vmem [shape: f32[64,128], index: 2, kind: input, shape index: {}]
  %s3 = inlined_call_operand.hbm [shape: f32[64,128], index: 3, kind: output, shape index: {}]
  %s4 = sld [smem:[#allocation0]]
  $region22: #{tpu_custom_call.1} parent=0
    _
  %s6 = ssub.s32 1, %s4
  %s7 = scalar_select 0, %s6, %s4
  $region1: #{tpu_custom_call.1} parent=0
    #allocation2 [shape = 'u8[32768]{0}', space=vmem, size = 0x8000, scoped, tag = 'output window, operand 0, single buffered']
    #allocation3 [shape = 's32[1]{0}', space=sflag, size = 0x4, scoped, tag = 'scoped memory for tpu_custom_call.1']
    %8 = vsyncpa [#allocation3], 0
    // Predicated region
    $region2: #{tpu_custom_call.1} parent=1 // pred_check
      _
    $region3: #{tpu_custom_call.1} parent=1 // pred_check_branch
      %10 = sbr.rel (0) target = $region5
    $region4: #{tpu_custom_call.1} parent=1 // pred_region
      _
    $region5: #{tpu_custom_call.1} parent=1 // pred_fallthru
      _
    // Predicated region
    $region6: #{tpu_custom_call.1} parent=1 // pred_check
      _
    $region7: #{tpu_custom_call.1} parent=1 // pred_check_branch
      %12 = sbr.rel (0) target = $region9
    $region8: #{tpu_custom_call.1} parent=1 // pred_region
      _
    $region9: #{tpu_custom_call.1} parent=1 // pred_fallthru
      _
    // Predicated region
    $region10: #{tpu_custom_call.1} parent=1 // pred_check
      _
    $region11: #{tpu_custom_call.1} parent=1 // pred_check_branch
      %14 = sbr.rel (0) target = $region13
    $region12: #{tpu_custom_call.1} parent=1 // pred_region
      _
    $region13: #{tpu_custom_call.1} parent=1 // pred_fallthru
      _
    %v15 = vld [vmem:[%s0] sm:$0xff]
    %v16 = vld [vmem:[%s0 + $0x8] sm:$0xff]
    %v17 = vld [vmem:[%s0 + $0x10] sm:$0xff]
    %v18 = vld [vmem:[%s0 + $0x18] sm:$0xff]
    %v19 = vld [vmem:[%s0 + $0x20] sm:$0xff]
    %v20 = vld [vmem:[%s0 + $0x28] sm:$0xff]
    %v21 = vld [vmem:[%s0 + $0x30] sm:$0xff]
    %v22 = vld [vmem:[%s0 + $0x38] sm:$0xff]
    %v23 = vld [vmem:[%s1] sm:$0xff]
    %v24 = vld [vmem:[%s1 + $0x8] sm:$0xff]
    %v25 = vld [vmem:[%s2] sm:$0xff]
    %v26 = vld [vmem:[%s2 + $0x8] sm:$0xff]
    %v27 = vld [vmem:[%s2 + $0x10] sm:$0xff]
    %v28 = vld [vmem:[%s2 + $0x18] sm:$0xff]
    %v29 = vld [vmem:[%s2 + $0x20] sm:$0xff]
    %v30 = vld [vmem:[%s2 + $0x28] sm:$0xff]
    %v31 = vld [vmem:[%s2 + $0x30] sm:$0xff]
    %v32 = vld [vmem:[%s2 + $0x38] sm:$0xff]
    %vm33 = vcmask 130048
    %v35 = vsel %vm33, %v15, 0
    %v38 = vsel %vm33, %v16, 0
    %v41 = vsel %vm33, %v17, 0
    %v44 = vsel %vm33, %v18, 0
    %v47 = vsel %vm33, %v19, 0
    %v50 = vsel %vm33, %v20, 0
    %v53 = vsel %vm33, %v21, 0
    %v56 = vsel %vm33, %v22, 0
    %58 = vmatprep.subr.mxu0 0.0
    %59 = vmatpush1.msra.mxu0 %v23
    %60 = vmatprep.subr.mxu0 0.0
    %61 = vmatpush1.msra.mxu0 %v24
    %62 = vmatprep.subr.mxu0 0.0
    %63 = vmatpush1.msra.mxu0 0.0
    %64 = vmatprep.subr.mxu0 0.0
    %65 = vmatpush1.msra.mxu0 0.0
    %66 = vmatprep.subr.mxu0 0.0
    %67 = vmatpush1.msra.mxu0 0.0
    %68 = vmatprep.subr.mxu0 0.0
    %69 = vmatpush1.msra.mxu0 0.0
    %70 = vmatprep.subr.mxu0 0.0
    %71 = vmatpush1.msra.mxu0 0.0
    %72 = vmatprep.subr.mxu0 0.0
    %73 = vmatpush1.msra.mxu0 0.0
    %74 = vmatprep.subr.mxu0 0.0
    %75 = vmatpush1.msra.mxu0 0.0
    %76 = vmatprep.subr.mxu0 0.0
    %77 = vmatpush1.msra.mxu0 0.0
    %78 = vmatprep.subr.mxu0 0.0
    %79 = vmatpush1.msra.mxu0 0.0
    %80 = vmatprep.subr.mxu0 0.0
    %81 = vmatpush1.msra.mxu0 0.0
    %82 = vmatprep.subr.mxu0 0.0
    %83 = vmatpush1.msra.mxu0 0.0
    %84 = vmatprep.subr.mxu0 0.0
    %85 = vmatpush1.msra.mxu0 0.0
    %86 = vmatprep.subr.mxu0 0.0
    %87 = vmatpush1.msra.mxu0 0.0
    %88 = vmatprep.subr.mxu0 0.0
    %89 = vmatpush1.msra.mxu0 0.0
    %90 = vmatprep.subr.mxu0 0.0
    %91 = vmatpush1.msra.mxu0 0.0
    %92 = vmatprep.subr.mxu0 0.0
    %93 = vmatpush1.msra.mxu0 0.0
    %94 = vmatprep.subr.mxu0 0.0
    %95 = vmatpush1.msra.mxu0 0.0
    %96 = vmatprep.subr.mxu0 0.0
    %97 = vmatpush1.msra.mxu0 0.0
    %98 = vmatprep.subr.mxu0 0.0
    %99 = vmatpush1.msra.mxu0 0.0
    %100 = vmatprep.subr.mxu0 0.0
    %101 = vmatpush1.msra.mxu0 0.0
    %102 = vmatprep.subr.mxu0 0.0
    %103 = vmatpush1.msra.mxu0 0.0
    %104 = vmatprep.subr.mxu0 0.0
    %105 = vmatpush1.msra.mxu0 0.0
    %106 = vmatprep.subr.mxu0 0.0
    %107 = vmatpush1.msra.mxu0 0.0
    %108 = vmatprep.subr.mxu0 0.0
    %109 = vmatpush1.msra.mxu0 0.0
    %110 = vmatprep.subr.mxu0 0.0
    %111 = vmatpush1.msra.mxu0 0.0
    %112 = vmatprep.subr.mxu0 0.0
    %113 = vmatpush1.msra.mxu0 0.0
    %114 = vmatprep.subr.mxu0 0.0
    %115 = vmatpush1.msra.mxu0 0.0
    %116 = vmatprep.subr.mxu0 0.0
    %117 = vmatpush1.msra.mxu0 0.0
    %118 = vmatprep.subr.mxu0 0.0
    %119 = vmatpush1.msra.mxu0 0.0
    %120 = vmatprep.subr.mxu0 0.0
    %121 = vmatpush1.msra.mxu0 0.0
    %122 = vmatprep.mubr.f32.mxu0 0.0
    %123 = vmatmul.mubr.f32.gmra.mrb[0].mxu0 %v35
    %v124 = vpop.f32.mrb[0].mxu0
    %v125 = vadd.f32 %v25, %v124
    %v126 = vpop.f32.mrb[0].mxu0
    %127 = vmatprep.mubr.f32.mxu0 0.0
    %128 = vmatmul.mubr.f32.gmra.mrb[0].mxu0 %v38
    %v129 = vpop.f32.mrb[0].mxu0
    %v130 = vadd.f32 %v26, %v129
    %v131 = vpop.f32.mrb[0].mxu0
    %132 = vmatprep.mubr.f32.mxu0 0.0
    %133 = vmatmul.mubr.f32.gmra.mrb[0].mxu0 %v41
    %v134 = vpop.f32.mrb[0].mxu0
    %v135 = vadd.f32 %v27, %v134
    %v136 = vpop.f32.mrb[0].mxu0
    %137 = vmatprep.mubr.f32.mxu0 0.0
    %138 = vmatmul.mubr.f32.gmra.mrb[0].mxu0 %v44
    %v139 = vpop.f32.mrb[0].mxu0
    %v140 = vadd.f32 %v28, %v139
    %v141 = vpop.f32.mrb[0].mxu0
    %142 = vmatprep.mubr.f32.mxu0 0.0
    %143 = vmatmul.mubr.f32.gmra.mrb[0].mxu0 %v47
    %v144 = vpop.f32.mrb[0].mxu0
    %v145 = vadd.f32 %v29, %v144
    %v146 = vpop.f32.mrb[0].mxu0
    %147 = vmatprep.mubr.f32.mxu0 0.0
    %148 = vmatmul.mubr.f32.gmra.mrb[0].mxu0 %v50
    %v149 = vpop.f32.mrb[0].mxu0
    %v150 = vadd.f32 %v30, %v149
    %v151 = vpop.f32.mrb[0].mxu0
    %152 = vmatprep.mubr.f32.mxu0 0.0
    %153 = vmatmul.mubr.f32.gmra.mrb[0].mxu0 %v53
    %v154 = vpop.f32.mrb[0].mxu0
    %v155 = vadd.f32 %v31, %v154
    %v156 = vpop.f32.mrb[0].mxu0
    %157 = vmatprep.mubr.f32.mxu0 0.0
    %158 = vmatmul.mubr.f32.gmra.mrb[0].mxu0 %v56
    %v159 = vpop.f32.mrb[0].mxu0
    %v160 = vadd.f32 %v32, %v159
    %v161 = vpop.f32.mrb[0].mxu0
    %162 = vdwg.mxu0
    %163 = vst [vmem:[#allocation2] sm:$0xff] %v125
    %164 = vst [vmem:[#allocation2 + $0x8] sm:$0xff] %v130
    %165 = vst [vmem:[#allocation2 + $0x10] sm:$0xff] %v135
    %166 = vst [vmem:[#allocation2 + $0x18] sm:$0xff] %v140
    %167 = vst [vmem:[#allocation2 + $0x20] sm:$0xff] %v145
    %168 = vst [vmem:[#allocation2 + $0x28] sm:$0xff] %v150
    %169 = vst [vmem:[#allocation2 + $0x30] sm:$0xff] %v155
    %170 = vst [vmem:[#allocation2 + $0x38] sm:$0xff] %v160
    // Predicated region
    $region14: #{tpu_custom_call.1} parent=1 // pred_check
      _
    $region15: #{tpu_custom_call.1} parent=1 // pred_check_branch
      %172 = sbr.rel (0) target = $region17
    $region16: #{tpu_custom_call.1} parent=1 // pred_region
      %s174 = ssub.s32 1024, 1024
      %175 = vsyncadd [#allocation3], %s174
      %s176 = sshll.u32 [#allocation2], 4
      %s177 = int_to_ptr.vmem [resolvable:$true] %s176
      %182 = dma.vmem_to_hbm [thread:$0]  %s177, 1024, %s3, [#allocation3], 128, 128, 8
    $region17: #{tpu_custom_call.1} parent=1 // pred_fallthru
      _
    // Predicated region
    $region18: #{tpu_custom_call.1} parent=1 // pred_check
      _
    $region19: #{tpu_custom_call.1} parent=1 // pred_check_branch
      %184 = sbr.rel (0) target = $region21
    $region20: #{tpu_custom_call.1} parent=1 // pred_region
      %185 = dma.done [#allocation3], 1024
    $region21: #{tpu_custom_call.1} parent=1 // pred_fallthru
      _
    %186 = vsyncpa [#allocation3], 1

</llo_original>
